<compile_context>
chip_gen: v7x
topology: tpu7x:2x2x1
jax: 0.10.0
libtpu: 0.0.40
codegen_flags: <defaults>
</compile_context>

<pallas_src>
import jax
import jax.numpy as jnp
from jax.experimental import pallas as pl
from jax.experimental.pallas import tpu as pltpu

LANE = 128
SUBLANE = 8


def _add3_kernel(a_ref, b_ref, c_ref, o_ref):
    # Pure VPU elementwise add on a lane-dense (block_rows, 128) tile.
    # Same association order as torch.add(x0, torch.add(x1, x2)).
    o_ref[...] = a_ref[...] + (b_ref[...] + c_ref[...])


def add_res(x0, x1, x2, *, block_rows=1024):
    """out = x0 + (x1 + x2), all inputs same shape/dtype."""
    assert x0.shape == x1.shape == x2.shape, "Add_res: shapes must match"
    assert x0.dtype == x1.dtype == x2.dtype, "Add_res: dtypes must match"
    orig_shape = x0.shape
    n = x0.size

    # Lane-dense view: rows of 128 elements.
    rows = pl.cdiv(n, LANE)
    # Block rows: multiple of 8 (sublane), whole problem in one step if small.
    rows_8 = ((rows + SUBLANE - 1) // SUBLANE) * SUBLANE
    blk = min(block_rows, rows_8)
    rows_p = ((rows + blk - 1) // blk) * blk
    n_pad = rows_p * LANE

    def prep(x):
        x = x.reshape(-1)
        if n_pad != n:  # only pads when n is not already tile-aligned
            x = jnp.pad(x, (0, n_pad - n))
        return x.reshape(rows_p, LANE)

    a, b, c = prep(x0), prep(x1), prep(x2)

    out = pl.pallas_call(
        _add3_kernel,
        out_shape=jax.ShapeDtypeStruct((rows_p, LANE), x0.dtype),
        grid=(rows_p // blk,),
        in_specs=[
            pl.BlockSpec((blk, LANE), lambda i: (i, 0)),
            pl.BlockSpec((blk, LANE), lambda i: (i, 0)),
            pl.BlockSpec((blk, LANE), lambda i: (i, 0)),
        ],
        out_specs=pl.BlockSpec((blk, LANE), lambda i: (i, 0)),
        compiler_params=pltpu.CompilerParams(
            dimension_semantics=("parallel",),   # megacore-friendly on v7x
            vmem_limit_bytes=64 * 1024 * 1024,
        ),
    )(a, b, c)

    out = out.reshape(-1)
    if n_pad != n:
        out = out[:n]
    return out.reshape(orig_shape)


# ------------------ pure-JAX reference (for validation) ------------------
def add_res_ref(x0, x1, x2):
    return x0 + (x1 + x2)


if __name__ == "__main__":
    # Shapes consistent with Add_res used on NCHW feature maps:
    # three tensors of shape (N=2, C=4, H=16, W=16).
    N, C, H, W = 2, 4, 16, 16

    key = jax.random.PRNGKey(0)
    k0, k1, k2 = jax.random.split(key, 3)
    x0 = jax.random.normal(k0, (N, C, H, W), dtype=jnp.float32)
    x1 = jax.random.normal(k1, (N, C, H, W), dtype=jnp.float32)
    x2 = jax.random.normal(k2, (N, C, H, W), dtype=jnp.float32)

    out = add_res(x0, x1, x2)
    out = jax.block_until_ready(out)

    ref = add_res_ref(x0, x1, x2)
    assert out.shape == (N, C, H, W)
    assert jnp.allclose(out, ref, atol=1e-6, rtol=1e-6), \
        f"max abs err {jnp.max(jnp.abs(out - ref))}"

    print("KERNEL_OK")
</pallas_src>

<mosaic_0001>
module attributes {stable_mosaic.version = 11 : i64} {
  func.func @_add3_kernel(%arg0: i32, %arg1: memref<16x128xf32, #tpu.memory_space<vmem>>, %arg2: memref<16x128xf32, #tpu.memory_space<vmem>>, %arg3: memref<16x128xf32, #tpu.memory_space<vmem>>, %arg4: memref<16x128xf32, #tpu.memory_space<vmem>>) attributes {dimension_semantics = [#tpu.dimension_semantics<parallel>], iteration_bounds = array<i64: 1>, scalar_prefetch = 0 : i64, scratch_operands = 0 : i64, tpu.core_type = #tpu.core_type<tc>, window_params = [{transform_indices = @transform_0, window_bounds = array<i64: 16, 128>}, {transform_indices = @transform_1, window_bounds = array<i64: 16, 128>}, {transform_indices = @transform_2, window_bounds = array<i64: 16, 128>}, {transform_indices = @transform_3, window_bounds = array<i64: 16, 128>}]} {
    %c0 = arith.constant 0 : index
    %c0_0 = arith.constant 0 : index
    %0 = vector.load %arg1[%c0, %c0_0] : memref<16x128xf32, #tpu.memory_space<vmem>>, vector<16x128xf32>
    %c0_1 = arith.constant 0 : index
    %c0_2 = arith.constant 0 : index
    %1 = vector.load %arg2[%c0_1, %c0_2] : memref<16x128xf32, #tpu.memory_space<vmem>>, vector<16x128xf32>
    %c0_3 = arith.constant 0 : index
    %c0_4 = arith.constant 0 : index
    %2 = vector.load %arg3[%c0_3, %c0_4] : memref<16x128xf32, #tpu.memory_space<vmem>>, vector<16x128xf32>
    %3 = arith.addf %1, %2 : vector<16x128xf32>
    %4 = arith.addf %0, %3 : vector<16x128xf32>
    %c0_5 = arith.constant 0 : index
    %c0_6 = arith.constant 0 : index
    %5 = vector.load %arg4[%c0_5, %c0_6] : memref<16x128xf32, #tpu.memory_space<vmem>>, vector<16x128xf32>
    tpu.vector_store %arg4[%c0_5, %c0_6], %4 {strides = array<i32>} : memref<16x128xf32, #tpu.memory_space<vmem>>, vector<16x128xf32>,
    return
  }
  func.func @transform_0(%arg0: i32) -> (i32, i32) {
    %c0_i32 = arith.constant 0 : i32
    %c0_i32_0 = arith.constant 0 : i32
    return %arg0, %c0_i32 : i32, i32
  }
  func.func @transform_1(%arg0: i32) -> (i32, i32) {
    %c0_i32 = arith.constant 0 : i32
    %c0_i32_0 = arith.constant 0 : i32
    return %arg0, %c0_i32 : i32, i32
  }
  func.func @transform_2(%arg0: i32) -> (i32, i32) {
    %c0_i32 = arith.constant 0 : i32
    %c0_i32_0 = arith.constant 0 : i32
    return %arg0, %c0_i32 : i32, i32
  }
  func.func @transform_3(%arg0: i32) -> (i32, i32) {
    %c0_i32 = arith.constant 0 : i32
    %c0_i32_0 = arith.constant 0 : i32
    return %arg0, %c0_i32 : i32, i32
  }
}

</mosaic_0001>

<llo_original>
// kernel: tpu_custom_call.1
$region0: #{tpu_custom_call.1}
  #allocation0 [shape = 'u32[]', space=smem, size = 0x4, offset = 0x4, fixed_abs, tag = 'smem constant byte address 0x4 - core index']
  #allocation1 [shape = 'u32[144,128]{1,0:T(1,128)}', space=vmem, size = 0x12000, scoped, tag = 'internal scratch']
  %s0 = inlined_call_operand.hbm [shape: f32[16,128], index: 0, kind: input, shape index: {}]
  %s1 = inlined_call_operand.hbm [shape: f32[16,128], index: 1, kind: input, shape index: {}]
  %s2 = inlined_call_operand.hbm [shape: f32[16,128], index: 2, kind: input, shape index: {}]
  %s3 = inlined_call_operand.hbm [shape: f32[16,128], index: 3, kind: output, shape index: {}]
  %s4 = sld [smem:[#allocation0]]
  $region34: #{tpu_custom_call.1} parent=0
    _
  %s6 = ssub.s32 1, %s4
  %s7 = scalar_select 0, %s6, %s4
  $region1: #{tpu_custom_call.1} parent=0
    #allocation2 [shape = 'u8[8192]{0}', space=vmem, size = 0x2000, scoped, tag = 'input window, operand 0, single buffered']
    #allocation3 [shape = 's32[1]{0}', space=sflag, size = 0x4, scoped, tag = 'scoped memory for tpu_custom_call.1']
    #allocation4 [shape = 's32[1]{0}', space=sflag, size = 0x4, scoped, tag = 'scoped memory for tpu_custom_call.1']
    #allocation5 [shape = 'u8[8192]{0}', space=vmem, size = 0x2000, scoped, tag = 'input window, operand 1, single buffered']
    #allocation6 [shape = 's32[1]{0}', space=sflag, size = 0x4, scoped, tag = 'scoped memory for tpu_custom_call.1']
    #allocation7 [shape = 'u8[8192]{0}', space=vmem, size = 0x2000, scoped, tag = 'input window, operand 2, single buffered']
    #allocation8 [shape = 'u8[8192]{0}', space=vmem, size = 0x2000, scoped, tag = 'output window, operand 0, single buffered']
    %8 = vsyncpa [#allocation3], 0
    %9 = vsyncpa [#allocation6], 0
    %10 = vsyncpa [#allocation4], 0
    // Predicated region
    $region2: #{tpu_custom_call.1} parent=1 // pred_check
      _
    $region3: #{tpu_custom_call.1} parent=1 // pred_check_branch
      %12 = sbr.rel (0) target = $region5
    $region4: #{tpu_custom_call.1} parent=1 // pred_region
      %s14 = ssub.s32 256, 256
      %15 = vsyncadd [#allocation3], %s14
      %s16 = sshll.u32 [#allocation2], 4
      %s17 = int_to_ptr.vmem [resolvable:$true] %s16
      %22 = dma.hbm_to_vmem [thread:$0]  %s0, 256, %s17, [#allocation3], 128, 128, 8
    $region5: #{tpu_custom_call.1} parent=1 // pred_fallthru
      _
    // Predicated region
    $region6: #{tpu_custom_call.1} parent=1 // pred_check
      _
    $region7: #{tpu_custom_call.1} parent=1 // pred_check_branch
      %24 = sbr.rel (0) target = $region9
    $region8: #{tpu_custom_call.1} parent=1 // pred_region
      %s26 = ssub.s32 256, 256
      %27 = vsyncadd [#allocation6], %s26
      %s28 = sshll.u32 [#allocation5], 4
      %s29 = int_to_ptr.vmem [resolvable:$true] %s28
      %34 = dma.hbm_to_vmem [thread:$0]  %s1, 256, %s29, [#allocation6], 128, 128, 8
    $region9: #{tpu_custom_call.1} parent=1 // pred_fallthru
      _
    // Predicated region
    $region10: #{tpu_custom_call.1} parent=1 // pred_check
      _
    $region11: #{tpu_custom_call.1} parent=1 // pred_check_branch
      %36 = sbr.rel (0) target = $region13
    $region12: #{tpu_custom_call.1} parent=1 // pred_region
      %s38 = ssub.s32 256, 256
      %39 = vsyncadd [#allocation6], %s38
      %s40 = sshll.u32 [#allocation7], 4
      %s41 = int_to_ptr.vmem [resolvable:$true] %s40
      %46 = dma.hbm_to_vmem [thread:$0]  %s2, 256, %s41, [#allocation6], 128, 128, 8
    $region13: #{tpu_custom_call.1} parent=1 // pred_fallthru
      _
    // Predicated region
    $region14: #{tpu_custom_call.1} parent=1 // pred_check
      _
    $region15: #{tpu_custom_call.1} parent=1 // pred_check_branch
      %48 = sbr.rel (0) target = $region17
    $region16: #{tpu_custom_call.1} parent=1 // pred_region
      %49 = dma.done [#allocation3], 256
    $region17: #{tpu_custom_call.1} parent=1 // pred_fallthru
      _
    // Predicated region
    $region18: #{tpu_custom_call.1} parent=1 // pred_check
      _
    $region19: #{tpu_custom_call.1} parent=1 // pred_check_branch
      %51 = sbr.rel (0) target = $region21
    $region20: #{tpu_custom_call.1} parent=1 // pred_region
      %52 = dma.done [#allocation6], 256
    $region21: #{tpu_custom_call.1} parent=1 // pred_fallthru
      _
    // Predicated region
    $region22: #{tpu_custom_call.1} parent=1 // pred_check
      _
    $region23: #{tpu_custom_call.1} parent=1 // pred_check_branch
      %54 = sbr.rel (0) target = $region25
    $region24: #{tpu_custom_call.1} parent=1 // pred_region
      %55 = dma.done [#allocation6], 256
    $region25: #{tpu_custom_call.1} parent=1 // pred_fallthru
      _
    %v56 = vld [vmem:[#allocation2] sm:$0xff]
    %v57 = vld [vmem:[#allocation2 + $0x8] sm:$0xff]
    %v58 = vld [vmem:[#allocation5] sm:$0xff]
    %v59 = vld [vmem:[#allocation5 + $0x8] sm:$0xff]
    %v60 = vld [vmem:[#allocation7] sm:$0xff]
    %v61 = vld [vmem:[#allocation7 + $0x8] sm:$0xff]
    %v62 = vadd.f32 %v58, %v60
    %v63 = vadd.f32 %v59, %v61
    %v64 = vadd.f32 %v56, %v62
    %v65 = vadd.f32 %v57, %v63
    %66 = vst [vmem:[#allocation8] sm:$0xff] %v64
    %67 = vst [vmem:[#allocation8 + $0x8] sm:$0xff] %v65
    // Predicated region
    $region26: #{tpu_custom_call.1} parent=1 // pred_check
      _
    $region27: #{tpu_custom_call.1} parent=1 // pred_check_branch
      %69 = sbr.rel (0) target = $region29
    $region28: #{tpu_custom_call.1} parent=1 // pred_region
      %s71 = ssub.s32 256, 256
      %72 = vsyncadd [#allocation4], %s71
      %s73 = sshll.u32 [#allocation8], 4
      %s74 = int_to_ptr.vmem [resolvable:$true] %s73
      %79 = dma.vmem_to_hbm [thread:$0]  %s74, 256, %s3, [#allocation4], 128, 128, 8
    $region29: #{tpu_custom_call.1} parent=1 // pred_fallthru
      _
    // Predicated region
    $region30: #{tpu_custom_call.1} parent=1 // pred_check
      _
    $region31: #{tpu_custom_call.1} parent=1 // pred_check_branch
      %81 = sbr.rel (0) target = $region33
    $region32: #{tpu_custom_call.1} parent=1 // pred_region
      %82 = dma.done [#allocation4], 256
    $region33: #{tpu_custom_call.1} parent=1 // pred_fallthru
      _
    %83 = vsyncpa [#allocation3], 1
    %84 = vsyncpa [#allocation6], 1
    %85 = vsyncpa [#allocation4], 1

</llo_original>
